<compile_context>
chip_gen: v6e
topology: v6e:2x2x1
jax: 0.10.0
libtpu: 0.0.40
codegen_flags: <defaults>
</compile_context>

<pallas_src>
import functools

import jax
import jax.numpy as jnp
from jax.experimental import pallas as pl
from jax.experimental.pallas import tpu as pltpu

EPS = 1e-5
PAD = 128          # lane-dense padded width for every feature dimension
IN_F = 33 * 3      # 99
H1 = 64
H2 = 32


def _vmem_capacity_bytes():
    """Physical per-core VMEM (v5e/v6e: 128 MiB, v7x: 64 MiB), conservative fallback."""
    try:
        cap = int(getattr(pltpu.get_tpu_info(), "vmem_capacity_bytes", 0))
        if cap > 0:
            return cap
    except Exception:
        pass
    return 64 * 1024 * 1024  # v7x per-TensorCore VMEM (safe everywhere)


# ---------------------------------------------------------------------------
# Fused single-block kernel: whole batch resident in VMEM (small/medium B).
# ---------------------------------------------------------------------------
def _mlp_fused_kernel(x_ref, w_ref, v_ref, o_ref):
    """x_ref: (B,128) input (99 real cols, rest 0)
       w_ref: (384,128) packed weights [W1p; W2p; W3p]
       v_ref: (8,128)  packed vectors: rows = g1, be1, g2, be2, b3
       o_ref: (B,num_classes) logits"""
    x = x_ref[...]
    inv_n = 1.0 / x.shape[0]

    # Linear(99->64); bias cancelled by train-mode BN mean subtraction.
    h = jnp.dot(x, w_ref[0:128, :], preferred_element_type=jnp.float32)

    # BatchNorm1d(64) folded into per-feature scale/shift, fused ReLU.
    mean = jnp.sum(h, axis=0, keepdims=True) * inv_n
    var = jnp.maximum(jnp.sum(h * h, axis=0, keepdims=True) * inv_n - mean * mean, 0.0)
    scale = v_ref[0:1, :] * jax.lax.rsqrt(var + EPS)
    shift = v_ref[1:2, :] - mean * scale
    h = jnp.maximum(h * scale + shift, 0.0)

    # Linear(64->32); bias cancelled.
    h = jnp.dot(h, w_ref[128:256, :], preferred_element_type=jnp.float32)

    # BatchNorm1d(32) folded + ReLU.
    mean = jnp.sum(h, axis=0, keepdims=True) * inv_n
    var = jnp.maximum(jnp.sum(h * h, axis=0, keepdims=True) * inv_n - mean * mean, 0.0)
    scale = v_ref[2:3, :] * jax.lax.rsqrt(var + EPS)
    shift = v_ref[3:4, :] - mean * scale
    h = jnp.maximum(h * scale + shift, 0.0)

    # Linear(32->num_classes) + b3; narrow only at the final store.
    out = jnp.dot(h, w_ref[256:384, :], preferred_element_type=jnp.float32) + v_ref[4:5, :]
    o_ref[...] = out[:, : o_ref.shape[1]].astype(o_ref.dtype)


# ---------------------------------------------------------------------------
# Batch-tiled 3-pass kernel: grid = (pass, batch_tile).
#   pass 0: accumulate sum / sum^2 of h1      (BN1 batch statistics)
#   pass 1: apply folded BN1+ReLU, accumulate sum / sum^2 of h2 (BN2 stats)
#   pass 2: apply folded BN2+ReLU, final linear, store logits
# ---------------------------------------------------------------------------
def _mlp_tiled_kernel(x_ref, w_ref, v_ref, o_ref,
                      sum1, ssq1, sum2, ssq2, fold,
                      *, n_rows, tile_b):
    p = pl.program_id(0)   # pass
    t = pl.program_id(1)   # batch tile
    inv_n = 1.0 / n_rows
    need_mask = (n_rows % tile_b) != 0   # static: only if batch was row-padded

    @pl.when((p == 0) & (t == 0))
    def _init():
        sum1[...] = jnp.zeros_like(sum1)
        ssq1[...] = jnp.zeros_like(ssq1)
        sum2[...] = jnp.zeros_like(sum2)
        ssq2[...] = jnp.zeros_like(ssq2)
        fold[...] = jnp.zeros_like(fold)

    # Fold BN1 / BN2 into per-feature scale+shift once, at each pass boundary.
    @pl.when((p == 1) & (t == 0))
    def _fold1():
        mean = sum1[...] * inv_n
        var = jnp.maximum(ssq1[...] * inv_n - mean * mean, 0.0)
        scale = v_ref[0:1, :] * jax.lax.rsqrt(var + EPS)
        fold[0:1, :] = scale
        fold[1:2, :] = v_ref[1:2, :] - mean * scale

    @pl.when((p == 2) & (t == 0))
    def _fold2():
        mean = sum2[...] * inv_n
        var = jnp.maximum(ssq2[...] * inv_n - mean * mean, 0.0)
        scale = v_ref[2:3, :] * jax.lax.rsqrt(var + EPS)
        fold[2:3, :] = scale
        fold[3:4, :] = v_ref[3:4, :] - mean * scale

    if need_mask:
        row = jax.lax.broadcasted_iota(jnp.int32, (tile_b, 1), 0) + t * tile_b
        valid = (row < n_rows).astype(jnp.float32)   # padded rows must not pollute stats
    else:
        valid = None

    # Needed by every pass.
    h1 = jnp.dot(x_ref[...], w_ref[0:128, :], preferred_element_type=jnp.float32)

    @pl.when(p == 0)
    def _stats1():
        hm = h1 * valid if need_mask else h1
        sum1[...] += jnp.sum(hm, axis=0, keepdims=True)
        ssq1[...] += jnp.sum(hm * hm, axis=0, keepdims=True)

    @pl.when(p == 1)
    def _stats2():
        a1 = jnp.maximum(h1 * fold[0:1, :] + fold[1:2, :], 0.0)
        h2 = jnp.dot(a1, w_ref[128:256, :], preferred_element_type=jnp.float32)
        hm = h2 * valid if need_mask else h2
        sum2[...] += jnp.sum(hm, axis=0, keepdims=True)
        ssq2[...] += jnp.sum(hm * hm, axis=0, keepdims=True)

    @pl.when(p == 2)
    def _apply():
        a1 = jnp.maximum(h1 * fold[0:1, :] + fold[1:2, :], 0.0)
        h2 = jnp.dot(a1, w_ref[128:256, :], preferred_element_type=jnp.float32)
        a2 = jnp.maximum(h2 * fold[2:3, :] + fold[3:4, :], 0.0)
        out = (jnp.dot(a2, w_ref[256:384, :], preferred_element_type=jnp.float32)
               + v_ref[4:5, :])
        o_ref[...] = out[:, : o_ref.shape[1]].astype(o_ref.dtype)


# ---------------------------------------------------------------------------
# Parameter packing (done ONCE, reused across forward calls).
# ---------------------------------------------------------------------------
def pack_params(params):
    """Pack all parameters into one (384,128) weight slab + one (8,128) vector slab."""
    num_classes = int(params["w3"].shape[1])
    assert num_classes <= PAD, "num_classes > 128 not supported by this packing"

    w1p = jnp.zeros((PAD, PAD), jnp.float32).at[:IN_F, :H1].set(params["w1"])
    w2p = jnp.zeros((PAD, PAD), jnp.float32).at[:H1, :H2].set(params["w2"])
    w3p = jnp.zeros((PAD, PAD), jnp.float32).at[:H2, :num_classes].set(params["w3"])
    w_packed = jnp.concatenate([w1p, w2p, w3p], axis=0)          # (384, 128)

    v = jnp.zeros((8, PAD), jnp.float32)
    v = v.at[0, :H1].set(params["g1"].reshape(-1))
    v = v.at[1, :H1].set(params["be1"].reshape(-1))
    v = v.at[2, :H2].set(params["g2"].reshape(-1))
    v = v.at[3, :H2].set(params["be2"].reshape(-1))
    v = v.at[4, :num_classes].set(params["b3"].reshape(-1))
    # b1/b2 intentionally not packed: cancelled by train-mode BatchNorm.
    return {"w": w_packed, "v": v, "num_classes": num_classes}


# ---------------------------------------------------------------------------
# Wrappers.
# ---------------------------------------------------------------------------
def _forward_fused(x_pad, packed, num_classes, vmem_cap):
    B = x_pad.shape[0]
    param_bytes = (packed["w"].size + packed["v"].size) * 4
    # x + out + ~4 live (B,128) f32 intermediates inside the body.
    need = B * 6 * PAD * 4 + param_bytes
    vmem_limit = int(min(max(2 * need, 32 * 1024 * 1024), (vmem_cap * 3) // 4))

    vmem = pl.BlockSpec(memory_space=pltpu.MemorySpace.VMEM)
    return pl.pallas_call(
        _mlp_fused_kernel,
        out_shape=jax.ShapeDtypeStruct((B, num_classes), jnp.float32),
        in_specs=[vmem, vmem, vmem],
        out_specs=vmem,
        compiler_params=pltpu.CompilerParams(vmem_limit_bytes=vmem_limit),
    )(x_pad, packed["w"], packed["v"])


def _forward_tiled(x_pad, packed, num_classes, n_rows, tile_b, vmem_cap):
    B_pad = x_pad.shape[0]
    num_tiles = B_pad // tile_b
    kernel = functools.partial(_mlp_tiled_kernel, n_rows=n_rows, tile_b=tile_b)

    # Per-step VMEM: double-buffered x/out tiles + params + ~4 live intermediates.
    need = (2 * tile_b * PAD * 4 + 2 * tile_b * PAD * 4
            + (packed["w"].size + packed["v"].size) * 4
            + 4 * tile_b * PAD * 4)
    vmem_limit = int(min(max(2 * need, 16 * 1024 * 1024), vmem_cap // 2))

    return pl.pallas_call(
        kernel,
        out_shape=jax.ShapeDtypeStruct((B_pad, num_classes), jnp.float32),
        grid_spec=pltpu.PrefetchScalarGridSpec(
            num_scalar_prefetch=0,
            grid=(3, num_tiles),                         # (pass, batch_tile)
            in_specs=[
                pl.BlockSpec((tile_b, PAD), lambda p, t: (t, 0)),
                pl.BlockSpec((3 * PAD, PAD), lambda p, t: (0, 0)),   # resident weights
                pl.BlockSpec((8, PAD), lambda p, t: (0, 0)),         # resident vectors
            ],
            out_specs=pl.BlockSpec((tile_b, num_classes), lambda p, t: (t, 0)),
            scratch_shapes=[
                pltpu.VMEM((1, PAD), jnp.float32),   # sum1
                pltpu.VMEM((1, PAD), jnp.float32),   # ssq1
                pltpu.VMEM((1, PAD), jnp.float32),   # sum2
                pltpu.VMEM((1, PAD), jnp.float32),   # ssq2
                pltpu.VMEM((4, PAD), jnp.float32),   # folded scale/shift (BN1, BN2)
            ]),
        compiler_params=pltpu.CompilerParams(
            # Both axes must stay sequential: the pass axis orders the BN
            # reductions and every tile shares the stats accumulators.
            dimension_semantics=("arbitrary", "arbitrary"),
            vmem_limit_bytes=vmem_limit),
    )(x_pad, packed["w"], packed["v"])


def mlp_forward(x, packed, *, tile_b=1024, force_tiled=False):
    """x: (B, 33, 3) float32. packed: result of pack_params. Returns (B, num_classes)."""
    B = x.shape[0]
    num_classes = packed["num_classes"]

    # Flatten (nn.Flatten) and zero-pad the contraction dim 99 -> 128 so every
    # matmul is an unmasked, aligned 128-wide MXU tile.
    x_flat = x.reshape(B, IN_F).astype(jnp.float32)
    x_pad = jnp.pad(x_flat, ((0, 0), (0, PAD - IN_F)))

    vmem_cap = _vmem_capacity_bytes()
    param_bytes = (packed["w"].size + packed["v"].size) * 4
    fused_need = B * 6 * PAD * 4 + param_bytes
    use_fused = (not force_tiled) and (2 * fused_need <= (vmem_cap * 3) // 4)

    if use_fused:
        return _forward_fused(x_pad, packed, num_classes, vmem_cap)

    # Batch-tiled 3-pass path: bounded VMEM, pipelined HBM traffic.
    tile_b = max(128, min(int(tile_b), 4096))
    B_pad = ((B + tile_b - 1) // tile_b) * tile_b
    if B_pad != B:
        x_pad = jnp.pad(x_pad, ((0, B_pad - B), (0, 0)))
    out = _forward_tiled(x_pad, packed, num_classes, B, tile_b, vmem_cap)
    return out[:B] if B_pad != B else out


# ---------------------------------------------------------------------------
# Parameter init + pure-JAX reference of the PyTorch forward.
# ---------------------------------------------------------------------------
def init_params(key, num_classes):
    ks = jax.random.split(key, 6)

    def linear(kw, kb, fan_in, fan_out):
        bound = 1.0 / jnp.sqrt(jnp.float32(fan_in))
        w = jax.random.uniform(kw, (fan_in, fan_out), jnp.float32, -bound, bound)
        b = jax.random.uniform(kb, (1, fan_out), jnp.float32, -bound, bound)
        return w, b

    w1, b1 = linear(ks[0], ks[1], IN_F, H1)
    w2, b2 = linear(ks[2], ks[3], H1, H2)
    w3, b3 = linear(ks[4], ks[5], H2, num_classes)
    return {
        # b1/b2 kept for state-dict parity with PyTorch; the kernels omit them
        # because training-mode BatchNorm cancels a preceding linear bias.
        "w1": w1, "b1": b1,
        "g1": jnp.ones((1, H1), jnp.float32), "be1": jnp.zeros((1, H1), jnp.float32),
        "w2": w2, "b2": b2,
        "g2": jnp.ones((1, H2), jnp.float32), "be2": jnp.zeros((1, H2), jnp.float32),
        "w3": w3, "b3": b3,
    }


def _reference(x, p):
    """Pure-JAX reference of the PyTorch forward (training-mode BN, with biases)."""
    h = x.reshape(x.shape[0], -1) @ p["w1"] + p["b1"]
    m, v = jnp.mean(h, 0, keepdims=True), jnp.var(h, 0, keepdims=True)
    h = jnp.maximum((h - m) / jnp.sqrt(v + EPS) * p["g1"] + p["be1"], 0.0)
    h = h @ p["w2"] + p["b2"]
    m, v = jnp.mean(h, 0, keepdims=True), jnp.var(h, 0, keepdims=True)
    h = jnp.maximum((h - m) / jnp.sqrt(v + EPS) * p["g2"] + p["be2"], 0.0)
    return h @ p["w3"] + p["b3"]


if __name__ == "__main__":
    key = jax.random.PRNGKey(0)
    k_x, k_p, k_x2 = jax.random.split(key, 3)

    num_classes = 5
    params = init_params(k_p, num_classes)
    packed = pack_params(params)          # pack ONCE, reuse for every forward

    # Small batch -> fused single-block path (direct (B, num_classes) output).
    x_small = jax.random.normal(k_x, (8, 33, 3), jnp.float32)
    out_small = jax.block_until_ready(mlp_forward(x_small, packed))
    ref_small = _reference(x_small, params)
    assert out_small.shape == (8, num_classes)
    assert jnp.allclose(out_small, ref_small, atol=5e-4, rtol=5e-4), "fused path mismatch"

    # Larger, non-tile-aligned batch -> batch-tiled 3-pass path (forced here
    # with a small tile so multi-tile accumulation + row masking is exercised).
    x_big = jax.random.normal(k_x2, (200, 33, 3), jnp.float32)
    out_big = jax.block_until_ready(
        mlp_forward(x_big, packed, tile_b=128, force_tiled=True))
    ref_big = _reference(x_big, params)
    assert out_big.shape == (200, num_classes)
    assert jnp.allclose(out_big, ref_big, atol=5e-4, rtol=5e-4), "tiled path mismatch"

    print("KERNEL_OK")
</pallas_src>

<mosaic_0001>
module attributes {stable_mosaic.version = 11 : i64} {
  func.func @_mlp_fused_kernel(%arg0: memref<8x128xf32, #tpu.memory_space<vmem>>, %arg1: memref<384x128xf32, #tpu.memory_space<vmem>>, %arg2: memref<8x128xf32, #tpu.memory_space<vmem>>, %arg3: memref<8x5xf32, #tpu.memory_space<vmem>>) attributes {dimension_semantics = [], scalar_prefetch = 0 : i64, scratch_operands = 0 : i64, tpu.core_type = #tpu.core_type<tc>} {
    %c0 = arith.constant 0 : index
    %c0_0 = arith.constant 0 : index
    %0 = vector.load %arg0[%c0, %c0_0] : memref<8x128xf32, #tpu.memory_space<vmem>>, vector<8x128xf32>
    %c0_1 = arith.constant 0 : index
    %c0_2 = arith.constant 0 : index
    %1 = vector.load %arg1[%c0_1, %c0_2] : memref<384x128xf32, #tpu.memory_space<vmem>>, vector<128x128xf32>
    %cst = arith.constant dense<0.000000e+00> : vector<8x128xf32>
    %2 = tpu.matmul %0, %1, %cst {dimension_numbers = #tpu.dot_dimension_numbers<[1], [0], [0], [1], [0, 0, 1, 1], [], []>} : vector<8x128xf32>, vector<128x128xf32>, vector<8x128xf32> -> vector<8x128xf32>
    %cst_3 = arith.constant dense<0.000000e+00> : vector<128xf32>
    %3 = vector.multi_reduction <add>, %2, %cst_3 [0] : vector<8x128xf32> to vector<128xf32>
    %4 = vector.shape_cast %3 : vector<128xf32> to vector<1x128xf32>
    %cst_4 = arith.constant 1.250000e-01 : f32
    %5 = vector.broadcast %cst_4 : f32 to vector<1x128xf32>
    %6 = arith.mulf %4, %5 : vector<1x128xf32>
    %7 = arith.mulf %2, %2 : vector<8x128xf32>
    %cst_5 = arith.constant dense<0.000000e+00> : vector<128xf32>
    %8 = vector.multi_reduction <add>, %7, %cst_5 [0] : vector<8x128xf32> to vector<128xf32>
    %9 = vector.shape_cast %8 : vector<128xf32> to vector<1x128xf32>
    %cst_6 = arith.constant 1.250000e-01 : f32
    %10 = vector.broadcast %cst_6 : f32 to vector<1x128xf32>
    %11 = arith.mulf %9, %10 : vector<1x128xf32>
    %12 = arith.mulf %6, %6 : vector<1x128xf32>
    %13 = arith.subf %11, %12 : vector<1x128xf32>
    %cst_7 = arith.constant 0.000000e+00 : f32
    %14 = vector.broadcast %cst_7 : f32 to vector<1x128xf32>
    %15 = arith.maximumf %13, %14 : vector<1x128xf32>
    %c0_8 = arith.constant 0 : index
    %c0_9 = arith.constant 0 : index
    %16 = vector.load %arg2[%c0_8, %c0_9] : memref<8x128xf32, #tpu.memory_space<vmem>>, vector<1x128xf32>
    %cst_10 = arith.constant 9.99999974E-6 : f32
    %17 = vector.broadcast %cst_10 : f32 to vector<1x128xf32>
    %18 = arith.addf %15, %17 : vector<1x128xf32>
    %19 = math.rsqrt %18 : vector<1x128xf32>
    %20 = arith.mulf %16, %19 : vector<1x128xf32>
    %c1 = arith.constant 1 : index
    %c0_11 = arith.constant 0 : index
    %21 = vector.load %arg2[%c1, %c0_11] : memref<8x128xf32, #tpu.memory_space<vmem>>, vector<1x128xf32>
    %22 = arith.mulf %6, %20 : vector<1x128xf32>
    %23 = arith.subf %21, %22 : vector<1x128xf32>
    %24 = vector.broadcast %20 : vector<1x128xf32> to vector<8x128xf32>
    %25 = arith.mulf %2, %24 : vector<8x128xf32>
    %26 = vector.broadcast %23 : vector<1x128xf32> to vector<8x128xf32>
    %27 = arith.addf %25, %26 : vector<8x128xf32>
    %cst_12 = arith.constant 0.000000e+00 : f32
    %28 = vector.broadcast %cst_12 : f32 to vector<8x128xf32>
    %29 = arith.maximumf %27, %28 : vector<8x128xf32>
    %c128 = arith.constant 128 : index
    %c0_13 = arith.constant 0 : index
    %30 = vector.load %arg1[%c128, %c0_13] : memref<384x128xf32, #tpu.memory_space<vmem>>, vector<128x128xf32>
    %cst_14 = arith.constant dense<0.000000e+00> : vector<8x128xf32>
    %31 = tpu.matmul %29, %30, %cst_14 {dimension_numbers = #tpu.dot_dimension_numbers<[1], [0], [0], [1], [0, 0, 1, 1], [], []>} : vector<8x128xf32>, vector<128x128xf32>, vector<8x128xf32> -> vector<8x128xf32>
    %cst_15 = arith.constant dense<0.000000e+00> : vector<128xf32>
    %32 = vector.multi_reduction <add>, %31, %cst_15 [0] : vector<8x128xf32> to vector<128xf32>
    %33 = vector.shape_cast %32 : vector<128xf32> to vector<1x128xf32>
    %cst_16 = arith.constant 1.250000e-01 : f32
    %34 = vector.broadcast %cst_16 : f32 to vector<1x128xf32>
    %35 = arith.mulf %33, %34 : vector<1x128xf32>
    %36 = arith.mulf %31, %31 : vector<8x128xf32>
    %cst_17 = arith.constant dense<0.000000e+00> : vector<128xf32>
    %37 = vector.multi_reduction <add>, %36, %cst_17 [0] : vector<8x128xf32> to vector<128xf32>
    %38 = vector.shape_cast %37 : vector<128xf32> to vector<1x128xf32>
    %cst_18 = arith.constant 1.250000e-01 : f32
    %39 = vector.broadcast %cst_18 : f32 to vector<1x128xf32>
    %40 = arith.mulf %38, %39 : vector<1x128xf32>
    %41 = arith.mulf %35, %35 : vector<1x128xf32>
    %42 = arith.subf %40, %41 : vector<1x128xf32>
    %cst_19 = arith.constant 0.000000e+00 : f32
    %43 = vector.broadcast %cst_19 : f32 to vector<1x128xf32>
    %44 = arith.maximumf %42, %43 : vector<1x128xf32>
    %c2 = arith.constant 2 : index
    %c0_20 = arith.constant 0 : index
    %45 = vector.load %arg2[%c2, %c0_20] : memref<8x128xf32, #tpu.memory_space<vmem>>, vector<1x128xf32>
    %cst_21 = arith.constant 9.99999974E-6 : f32
    %46 = vector.broadcast %cst_21 : f32 to vector<1x128xf32>
    %47 = arith.addf %44, %46 : vector<1x128xf32>
    %48 = math.rsqrt %47 : vector<1x128xf32>
    %49 = arith.mulf %45, %48 : vector<1x128xf32>
    %c3 = arith.constant 3 : index
    %c0_22 = arith.constant 0 : index
    %50 = vector.load %arg2[%c3, %c0_22] : memref<8x128xf32, #tpu.memory_space<vmem>>, vector<1x128xf32>
    %51 = arith.mulf %35, %49 : vector<1x128xf32>
    %52 = arith.subf %50, %51 : vector<1x128xf32>
    %53 = vector.broadcast %49 : vector<1x128xf32> to vector<8x128xf32>
    %54 = arith.mulf %31, %53 : vector<8x128xf32>
    %55 = vector.broadcast %52 : vector<1x128xf32> to vector<8x128xf32>
    %56 = arith.addf %54, %55 : vector<8x128xf32>
    %cst_23 = arith.constant 0.000000e+00 : f32
    %57 = vector.broadcast %cst_23 : f32 to vector<8x128xf32>
    %58 = arith.maximumf %56, %57 : vector<8x128xf32>
    %c256 = arith.constant 256 : index
    %c0_24 = arith.constant 0 : index
    %59 = vector.load %arg1[%c256, %c0_24] : memref<384x128xf32, #tpu.memory_space<vmem>>, vector<128x128xf32>
    %cst_25 = arith.constant dense<0.000000e+00> : vector<8x128xf32>
    %60 = tpu.matmul %58, %59, %cst_25 {dimension_numbers = #tpu.dot_dimension_numbers<[1], [0], [0], [1], [0, 0, 1, 1], [], []>} : vector<8x128xf32>, vector<128x128xf32>, vector<8x128xf32> -> vector<8x128xf32>
    %c4 = arith.constant 4 : index
    %c0_26 = arith.constant 0 : index
    %61 = vector.load %arg2[%c4, %c0_26] : memref<8x128xf32, #tpu.memory_space<vmem>>, vector<1x128xf32>
    %62 = vector.broadcast %61 : vector<1x128xf32> to vector<8x128xf32>
    %63 = arith.addf %60, %62 : vector<8x128xf32>
    %64 = vector.extract_strided_slice %63 {offsets = [0, 0], sizes = [8, 5], strides = [1, 1]} : vector<8x128xf32> to vector<8x5xf32>
    %c0_27 = arith.constant 0 : index
    %c0_28 = arith.constant 0 : index
    %65 = vector.load %arg3[%c0_27, %c0_28] : memref<8x5xf32, #tpu.memory_space<vmem>>, vector<8x5xf32>
    tpu.vector_store %arg3[%c0_27, %c0_28], %64 {strides = array<i32>} : memref<8x5xf32, #tpu.memory_space<vmem>>, vector<8x5xf32>,
    return
  }
}

</mosaic_0001>

<llo_original>
// kernel: tpu_custom_call.1
$region0: #{tpu_custom_call.1}
  #allocation0 [shape = 'u32[]', space=smem, size = 0x4, offset = 0x4, fixed_abs, tag = 'smem constant byte address 0x4 - core index']
  #allocation1 [shape = 'u32[144,128]{1,0:T(1,128)}', space=vmem, size = 0x12000, scoped, tag = 'internal scratch']
  %s0 = inlined_call_operand.hbm [shape: f32[8,128], index: 0, kind: input, shape index: {}]
  %s1 = inlined_call_operand.hbm [shape: f32[384,128], index: 1, kind: input, shape index: {}]
  %s2 = inlined_call_operand.hbm [shape: f32[8,128], index: 2, kind: input, shape index: {}]
  %s3 = inlined_call_operand.hbm [shape: f32[8,5], index: 3, kind: output, shape index: {}]
  %s4 = sld [smem:[#allocation0]]
  $region34: #{tpu_custom_call.1} parent=0
    _
  %s6 = ssub.s32 1, %s4
  %s7 = scalar_select 0, %s6, %s4
  $region1: #{tpu_custom_call.1} parent=0
    #allocation2 [shape = 'u8[4096]{0}', space=vmem, size = 0x1000, scoped, tag = 'input window, operand 0, single buffered']
    #allocation3 [shape = 's32[1]{0}', space=sflag, size = 0x4, scoped, tag = 'scoped memory for tpu_custom_call.1']
    #allocation4 [shape = 's32[1]{0}', space=sflag, size = 0x4, scoped, tag = 'scoped memory for tpu_custom_call.1']
    #allocation5 [shape = 'u8[196608]{0}', space=vmem, size = 0x30000, scoped, tag = 'input window, operand 1, single buffered']
    #allocation6 [shape = 's32[1]{0}', space=sflag, size = 0x4, scoped, tag = 'scoped memory for tpu_custom_call.1']
    #allocation7 [shape = 'u8[4096]{0}', space=vmem, size = 0x1000, scoped, tag = 'input window, operand 2, single buffered']
    #allocation8 [shape = 'u8[4096]{0}', space=vmem, size = 0x1000, scoped, tag = 'output window, operand 0, single buffered']
    %8 = vsyncpa [#allocation3], 0
    %9 = vsyncpa [#allocation6], 0
    %10 = vsyncpa [#allocation4], 0
    // Predicated region
    $region2: #{tpu_custom_call.1} parent=1 // pred_check
      _
    $region3: #{tpu_custom_call.1} parent=1 // pred_check_branch
      %12 = sbr.rel (0) target = $region5
    $region4: #{tpu_custom_call.1} parent=1 // pred_region
      %s14 = ssub.s32 128, 128
      %15 = vsyncadd [#allocation3], %s14
      %s17 = sshll.u32 [#allocation2], 4
      %s18 = int_to_ptr.vmem [resolvable:$true] %s17
      %20 = dma.hbm_to_vmem [thread:$0]  %s0, 128, %s18, [#allocation3]
    $region5: #{tpu_custom_call.1} parent=1 // pred_fallthru
      _
    // Predicated region
    $region6: #{tpu_custom_call.1} parent=1 // pred_check
      _
    $region7: #{tpu_custom_call.1} parent=1 // pred_check_branch
      %22 = sbr.rel (0) target = $region9
    $region8: #{tpu_custom_call.1} parent=1 // pred_region
      %s24 = ssub.s32 6144, 6144
      %25 = vsyncadd [#allocation6], %s24
      %s26 = sshll.u32 [#allocation5], 4
      %s27 = int_to_ptr.vmem [resolvable:$true] %s26
      %32 = dma.hbm_to_vmem [thread:$0]  %s1, 6144, %s27, [#allocation6], 128, 128, 8
    $region9: #{tpu_custom_call.1} parent=1 // pred_fallthru
      _
    // Predicated region
    $region10: #{tpu_custom_call.1} parent=1 // pred_check
      _
    $region11: #{tpu_custom_call.1} parent=1 // pred_check_branch
      %34 = sbr.rel (0) target = $region13
    $region12: #{tpu_custom_call.1} parent=1 // pred_region
      %s36 = ssub.s32 128, 128
      %37 = vsyncadd [#allocation6], %s36
      %s39 = sshll.u32 [#allocation7], 4
      %s40 = int_to_ptr.vmem [resolvable:$true] %s39
      %42 = dma.hbm_to_vmem [thread:$0]  %s2, 128, %s40, [#allocation6]
    $region13: #{tpu_custom_call.1} parent=1 // pred_fallthru
      _
    // Predicated region
    $region14: #{tpu_custom_call.1} parent=1 // pred_check
      _
    $region15: #{tpu_custom_call.1} parent=1 // pred_check_branch
      %44 = sbr.rel (0) target = $region17
    $region16: #{tpu_custom_call.1} parent=1 // pred_region
      %45 = dma.done [#allocation3], 128
    $region17: #{tpu_custom_call.1} parent=1 // pred_fallthru
      _
    // Predicated region
    $region18: #{tpu_custom_call.1} parent=1 // pred_check
      _
    $region19: #{tpu_custom_call.1} parent=1 // pred_check_branch
      %47 = sbr.rel (0) target = $region21
    $region20: #{tpu_custom_call.1} parent=1 // pred_region
      %48 = dma.done [#allocation6], 6144
    $region21: #{tpu_custom_call.1} parent=1 // pred_fallthru
      _
    // Predicated region
    $region22: #{tpu_custom_call.1} parent=1 // pred_check
      _
    $region23: #{tpu_custom_call.1} parent=1 // pred_check_branch
      %50 = sbr.rel (0) target = $region25
    $region24: #{tpu_custom_call.1} parent=1 // pred_region
      %51 = dma.done [#allocation6], 128
    $region25: #{tpu_custom_call.1} parent=1 // pred_fallthru
      _
    %v52 = vld [vmem:[#allocation2] sm:$0xff]
    %v53 = vld [vmem:[#allocation5] sm:$0xff]
    %v54 = vld [vmem:[#allocation5 + $0x8] sm:$0xff]
    %v55 = vld [vmem:[#allocation5 + $0x10] sm:$0xff]
    %v56 = vld [vmem:[#allocation5 + $0x18] sm:$0xff]
    %v57 = vld [vmem:[#allocation5 + $0x20] sm:$0xff]
    %v58 = vld [vmem:[#allocation5 + $0x28] sm:$0xff]
    %v59 = vld [vmem:[#allocation5 + $0x30] sm:$0xff]
    %v60 = vld [vmem:[#allocation5 + $0x38] sm:$0xff]
    %v61 = vld [vmem:[#allocation5 + $0x40] sm:$0xff]
    %v62 = vld [vmem:[#allocation5 + $0x48] sm:$0xff]
    %v63 = vld [vmem:[#allocation5 + $0x50] sm:$0xff]
    %v64 = vld [vmem:[#allocation5 + $0x58] sm:$0xff]
    %v65 = vld [vmem:[#allocation5 + $0x60] sm:$0xff]
    %v66 = vld [vmem:[#allocation5 + $0x68] sm:$0xff]
    %v67 = vld [vmem:[#allocation5 + $0x70] sm:$0xff]
    %v68 = vld [vmem:[#allocation5 + $0x78] sm:$0xff]
    %69 = vmatprep.subr.mxu0 0.0
    %70 = vmatpush1.msra.mxu0 %v68
    %71 = vmatprep.subr.mxu0 0.0
    %72 = vmatpush1.msra.mxu0 %v67
    %73 = vmatprep.subr.mxu0 0.0
    %74 = vmatpush1.msra.mxu0 %v66
    %75 = vmatprep.subr.mxu0 0.0
    %76 = vmatpush1.msra.mxu0 %v65
    %77 = vmatprep.subr.mxu0 0.0
    %78 = vmatpush1.msra.mxu0 %v64
    %79 = vmatprep.subr.mxu0 0.0
    %80 = vmatpush1.msra.mxu0 %v63
    %81 = vmatprep.subr.mxu0 0.0
    %82 = vmatpush1.msra.mxu0 %v62
    %83 = vmatprep.subr.mxu0 0.0
    %84 = vmatpush1.msra.mxu0 %v61
    %85 = vmatprep.subr.mxu0 0.0
    %86 = vmatpush1.msra.mxu0 %v60
    %87 = vmatprep.subr.mxu0 0.0
    %88 = vmatpush1.msra.mxu0 %v59
    %89 = vmatprep.subr.mxu0 0.0
    %90 = vmatpush1.msra.mxu0 %v58
    %91 = vmatprep.subr.mxu0 0.0
    %92 = vmatpush1.msra.mxu0 %v57
    %93 = vmatprep.subr.mxu0 0.0
    %94 = vmatpush1.msra.mxu0 %v56
    %95 = vmatprep.subr.mxu0 0.0
    %96 = vmatpush1.msra.mxu0 %v55
    %97 = vmatprep.subr.mxu0 0.0
    %98 = vmatpush1.msra.mxu0 %v54
    %99 = vmatprep.subr.mxu0 0.0
    %100 = vmatpush1.msra.mxu0 %v53
    %101 = vmatprep.subr.mxu0 0.0
    %102 = vmatpush2.msra.mxu0 0.0
    %103 = vmatprep.subr.mxu0 0.0
    %104 = vmatpush2.msra.mxu0 0.0
    %105 = vmatprep.subr.mxu0 0.0
    %106 = vmatpush2.msra.mxu0 0.0
    %107 = vmatprep.subr.mxu0 0.0
    %108 = vmatpush2.msra.mxu0 0.0
    %109 = vmatprep.subr.mxu0 0.0
    %110 = vmatpush2.msra.mxu0 0.0
    %111 = vmatprep.subr.mxu0 0.0
    %112 = vmatpush2.msra.mxu0 0.0
    %113 = vmatprep.subr.mxu0 0.0
    %114 = vmatpush2.msra.mxu0 0.0
    %115 = vmatprep.subr.mxu0 0.0
    %116 = vmatpush2.msra.mxu0 0.0
    %117 = vmatprep.subr.mxu0 0.0
    %118 = vmatpush2.msra.mxu0 0.0
    %119 = vmatprep.subr.mxu0 0.0
    %120 = vmatpush2.msra.mxu0 0.0
    %121 = vmatprep.subr.mxu0 0.0
    %122 = vmatpush2.msra.mxu0 0.0
    %123 = vmatprep.subr.mxu0 0.0
    %124 = vmatpush2.msra.mxu0 0.0
    %125 = vmatprep.subr.mxu0 0.0
    %126 = vmatpush2.msra.mxu0 0.0
    %127 = vmatprep.subr.mxu0 0.0
    %128 = vmatpush2.msra.mxu0 0.0
    %129 = vmatprep.subr.mxu0 0.0
    %130 = vmatpush2.msra.mxu0 0.0
    %131 = vmatprep.subr.mxu0 0.0
    %132 = vmatpush2.msra.mxu0 0.0
    %133 = vmatprep.mubr.f32.mxu0 0.0
    %134 = vmatmul.mubr.f32.gmra.mxu0 %v52
    %v135 = vpop.f32.mrf.mxu0
    %v136 = vadd.f32 0.0, %v135
    %v137 = vpop.f32.mrf.mxu0
    %138 = vdwg.mxu0
    %v139 = vrot.slane %v136, 4
    %v140 = vadd.f32 %v136, %v139
    %v141 = vrot.slane %v140, 2
    %v142 = vadd.f32 %v140, %v141
    %v143 = vrot.slane %v142, 1
    %v144 = vadd.f32 %v142, %v143
    %v145 = vmul.f32 %v144, 0.125
    %v146 = vmul.f32 %v136, %v136
    %v147 = vrot.slane %v146, 4
    %v148 = vadd.f32 %v146, %v147
    %v149 = vrot.slane %v148, 2
    %v150 = vadd.f32 %v148, %v149
    %v151 = vrot.slane %v150, 1
    %v152 = vadd.f32 %v150, %v151
    %v153 = vmul.f32 %v152, 0.125
    %v154 = vmul.f32 %v145, %v145
    %v155 = vsub.f32 %v153, %v154
    %v156 = vmax.f32 %v155, 0.0
    %v157 = vld [vmem:[#allocation7] sm:$0x1]
    %v158 = vadd.f32 %v156, 1e-05
    %v159 = vrsqrt.pop %v158
    %v160 = vmul.f32 %v157, %v159
    %v161 = vld [vmem:[#allocation7 + $0x1] sm:$0x1]
    %v162 = vmul.f32 %v145, %v160
    %v163 = vsub.f32 %v161, %v162
    %v164 = vlaneseq
    %v165 = vshrl.u32 %v164, 7
    %v166 = vsub.s32 0, %v165
    %v167 = vrot.slane %v160, %v166
    %v168 = vmul.f32 %v136, %v167
    %v169 = vlaneseq
    %v170 = vshrl.u32 %v169, 7
    %v171 = vsub.s32 0, %v170
    %v172 = vrot.slane %v163, %v171
    %v173 = vadd.f32 %v168, %v172
    %v174 = vmax.f32 %v173, 0.0
    %v175 = vld [vmem:[#allocation5 + $0x80] sm:$0xff]
    %v176 = vld [vmem:[#allocation5 + $0x88] sm:$0xff]
    %v177 = vld [vmem:[#allocation5 + $0x90] sm:$0xff]
    %v178 = vld [vmem:[#allocation5 + $0x98] sm:$0xff]
    %v179 = vld [vmem:[#allocation5 + $0xa0] sm:$0xff]
    %v180 = vld [vmem:[#allocation5 + $0xa8] sm:$0xff]
    %v181 = vld [vmem:[#allocation5 + $0xb0] sm:$0xff]
    %v182 = vld [vmem:[#allocation5 + $0xb8] sm:$0xff]
    %v183 = vld [vmem:[#allocation5 + $0xc0] sm:$0xff]
    %v184 = vld [vmem:[#allocation5 + $0xc8] sm:$0xff]
    %v185 = vld [vmem:[#allocation5 + $0xd0] sm:$0xff]
    %v186 = vld [vmem:[#allocation5 + $0xd8] sm:$0xff]
    %v187 = vld [vmem:[#allocation5 + $0xe0] sm:$0xff]
    %v188 = vld [vmem:[#allocation5 + $0xe8] sm:$0xff]
    %v189 = vld [vmem:[#allocation5 + $0xf0] sm:$0xff]
    %v190 = vld [vmem:[#allocation5 + $0xf8] sm:$0xff]
    %191 = vmatprep.subr.mxu0 0.0
    %192 = vmatpush1.msra.mxu0 %v190
    %193 = vmatprep.subr.mxu0 0.0
    %194 = vmatpush1.msra.mxu0 %v189
    %195 = vmatprep.subr.mxu0 0.0
    %196 = vmatpush1.msra.mxu0 %v188
    %197 = vmatprep.subr.mxu0 0.0
    %198 = vmatpush1.msra.mxu0 %v187
    %199 = vmatprep.subr.mxu0 0.0
    %200 = vmatpush1.msra.mxu0 %v186
    %201 = vmatprep.subr.mxu0 0.0
    %202 = vmatpush1.msra.mxu0 %v185
    %203 = vmatprep.subr.mxu0 0.0
    %204 = vmatpush1.msra.mxu0 %v184
    %205 = vmatprep.subr.mxu0 0.0
    %206 = vmatpush1.msra.mxu0 %v183
    %207 = vmatprep.subr.mxu0 0.0
    %208 = vmatpush1.msra.mxu0 %v182
    %209 = vmatprep.subr.mxu0 0.0
    %210 = vmatpush1.msra.mxu0 %v181
    %211 = vmatprep.subr.mxu0 0.0
    %212 = vmatpush1.msra.mxu0 %v180
    %213 = vmatprep.subr.mxu0 0.0
    %214 = vmatpush1.msra.mxu0 %v179
    %215 = vmatprep.subr.mxu0 0.0
    %216 = vmatpush1.msra.mxu0 %v178
    %217 = vmatprep.subr.mxu0 0.0
    %218 = vmatpush1.msra.mxu0 %v177
    %219 = vmatprep.subr.mxu0 0.0
    %220 = vmatpush1.msra.mxu0 %v176
    %221 = vmatprep.subr.mxu0 0.0
    %222 = vmatpush1.msra.mxu0 %v175
    %223 = vmatprep.subr.mxu0 0.0
    %224 = vmatpush2.msra.mxu0 0.0
    %225 = vmatprep.subr.mxu0 0.0
    %226 = vmatpush2.msra.mxu0 0.0
    %227 = vmatprep.subr.mxu0 0.0
    %228 = vmatpush2.msra.mxu0 0.0
    %229 = vmatprep.subr.mxu0 0.0
    %230 = vmatpush2.msra.mxu0 0.0
    %231 = vmatprep.subr.mxu0 0.0
    %232 = vmatpush2.msra.mxu0 0.0
    %233 = vmatprep.subr.mxu0 0.0
    %234 = vmatpush2.msra.mxu0 0.0
    %235 = vmatprep.subr.mxu0 0.0
    %236 = vmatpush2.msra.mxu0 0.0
    %237 = vmatprep.subr.mxu0 0.0
    %238 = vmatpush2.msra.mxu0 0.0
    %239 = vmatprep.subr.mxu0 0.0
    %240 = vmatpush2.msra.mxu0 0.0
    %241 = vmatprep.subr.mxu0 0.0
    %242 = vmatpush2.msra.mxu0 0.0
    %243 = vmatprep.subr.mxu0 0.0
    %244 = vmatpush2.msra.mxu0 0.0
    %245 = vmatprep.subr.mxu0 0.0
    %246 = vmatpush2.msra.mxu0 0.0
    %247 = vmatprep.subr.mxu0 0.0
    %248 = vmatpush2.msra.mxu0 0.0
    %249 = vmatprep.subr.mxu0 0.0
    %250 = vmatpush2.msra.mxu0 0.0
    %251 = vmatprep.subr.mxu0 0.0
    %252 = vmatpush2.msra.mxu0 0.0
    %253 = vmatprep.subr.mxu0 0.0
    %254 = vmatpush2.msra.mxu0 0.0
    %255 = vmatprep.mubr.f32.mxu0 0.0
    %256 = vmatmul.mubr.f32.gmra.mxu0 %v174
    %v257 = vpop.f32.mrf.mxu0
    %v258 = vadd.f32 0.0, %v257
    %v259 = vpop.f32.mrf.mxu0
    %260 = vdwg.mxu0
    %v261 = vrot.slane %v258, 4
    %v262 = vadd.f32 %v258, %v261
    %v263 = vrot.slane %v262, 2
    %v264 = vadd.f32 %v262, %v263
    %v265 = vrot.slane %v264, 1
    %v266 = vadd.f32 %v264, %v265
    %v267 = vmul.f32 %v266, 0.125
    %v268 = vmul.f32 %v258, %v258
    %v269 = vrot.slane %v268, 4
    %v270 = vadd.f32 %v268, %v269
    %v271 = vrot.slane %v270, 2
    %v272 = vadd.f32 %v270, %v271
    %v273 = vrot.slane %v272, 1
    %v274 = vadd.f32 %v272, %v273
    %v275 = vmul.f32 %v274, 0.125
    %v276 = vmul.f32 %v267, %v267
    %v277 = vsub.f32 %v275, %v276
    %v278 = vmax.f32 %v277, 0.0
    %v279 = vld [vmem:[#allocation7 + $0x2] sm:$0x1]
    %v280 = vadd.f32 %v278, 1e-05
    %v281 = vrsqrt.pop %v280
    %v282 = vmul.f32 %v279, %v281
    %v283 = vld [vmem:[#allocation7 + $0x3] sm:$0x1]
    %v284 = vmul.f32 %v267, %v282
    %v285 = vsub.f32 %v283, %v284
    %v286 = vlaneseq
    %v287 = vshrl.u32 %v286, 7
    %v288 = vsub.s32 0, %v287
    %v289 = vrot.slane %v282, %v288
    %v290 = vmul.f32 %v258, %v289
    %v291 = vlaneseq
    %v292 = vshrl.u32 %v291, 7
    %v293 = vsub.s32 0, %v292
    %v294 = vrot.slane %v285, %v293
    %v295 = vadd.f32 %v290, %v294
    %v296 = vmax.f32 %v295, 0.0
    %v297 = vld [vmem:[#allocation5 + $0x100] sm:$0xff]
    %v298 = vld [vmem:[#allocation5 + $0x108] sm:$0xff]
    %v299 = vld [vmem:[#allocation5 + $0x110] sm:$0xff]
    %v300 = vld [vmem:[#allocation5 + $0x118] sm:$0xff]
    %v301 = vld [vmem:[#allocation5 + $0x120] sm:$0xff]
    %v302 = vld [vmem:[#allocation5 + $0x128] sm:$0xff]
    %v303 = vld [vmem:[#allocation5 + $0x130] sm:$0xff]
    %v304 = vld [vmem:[#allocation5 + $0x138] sm:$0xff]
    %v305 = vld [vmem:[#allocation5 + $0x140] sm:$0xff]
    %v306 = vld [vmem:[#allocation5 + $0x148] sm:$0xff]
    %v307 = vld [vmem:[#allocation5 + $0x150] sm:$0xff]
    %v308 = vld [vmem:[#allocation5 + $0x158] sm:$0xff]
    %v309 = vld [vmem:[#allocation5 + $0x160] sm:$0xff]
    %v310 = vld [vmem:[#allocation5 + $0x168] sm:$0xff]
    %v311 = vld [vmem:[#allocation5 + $0x170] sm:$0xff]
    %v312 = vld [vmem:[#allocation5 + $0x178] sm:$0xff]
    %v313 = vld [vmem:[#allocation7 + $0x4] sm:$0x1]
    %v314 = vlaneseq
    %v315 = vshrl.u32 %v314, 7
    %v316 = vsub.s32 0, %v315
    %v317 = vrot.slane %v313, %v316
    %318 = vmatprep.subr.mxu0 0.0
    %319 = vmatpush1.msra.mxu0 %v312
    %320 = vmatprep.subr.mxu0 0.0
    %321 = vmatpush1.msra.mxu0 %v311
    %322 = vmatprep.subr.mxu0 0.0
    %323 = vmatpush1.msra.mxu0 %v310
    %324 = vmatprep.subr.mxu0 0.0
    %325 = vmatpush1.msra.mxu0 %v309
    %326 = vmatprep.subr.mxu0 0.0
    %327 = vmatpush1.msra.mxu0 %v308
    %328 = vmatprep.subr.mxu0 0.0
    %329 = vmatpush1.msra.mxu0 %v307
    %330 = vmatprep.subr.mxu0 0.0
    %331 = vmatpush1.msra.mxu0 %v306
    %332 = vmatprep.subr.mxu0 0.0
    %333 = vmatpush1.msra.mxu0 %v305
    %334 = vmatprep.subr.mxu0 0.0
    %335 = vmatpush1.msra.mxu0 %v304
    %336 = vmatprep.subr.mxu0 0.0
    %337 = vmatpush1.msra.mxu0 %v303
    %338 = vmatprep.subr.mxu0 0.0
    %339 = vmatpush1.msra.mxu0 %v302
    %340 = vmatprep.subr.mxu0 0.0
    %341 = vmatpush1.msra.mxu0 %v301
    %342 = vmatprep.subr.mxu0 0.0
    %343 = vmatpush1.msra.mxu0 %v300
    %344 = vmatprep.subr.mxu0 0.0
    %345 = vmatpush1.msra.mxu0 %v299
    %346 = vmatprep.subr.mxu0 0.0
    %347 = vmatpush1.msra.mxu0 %v298
    %348 = vmatprep.subr.mxu0 0.0
    %349 = vmatpush1.msra.mxu0 %v297
    %350 = vmatprep.subr.mxu0 0.0
    %351 = vmatpush2.msra.mxu0 0.0
    %352 = vmatprep.subr.mxu0 0.0
    %353 = vmatpush2.msra.mxu0 0.0
    %354 = vmatprep.subr.mxu0 0.0
    %355 = vmatpush2.msra.mxu0 0.0
    %356 = vmatprep.subr.mxu0 0.0
    %357 = vmatpush2.msra.mxu0 0.0
    %358 = vmatprep.subr.mxu0 0.0
    %359 = vmatpush2.msra.mxu0 0.0
    %360 = vmatprep.subr.mxu0 0.0
    %361 = vmatpush2.msra.mxu0 0.0
    %362 = vmatprep.subr.mxu0 0.0
    %363 = vmatpush2.msra.mxu0 0.0
    %364 = vmatprep.subr.mxu0 0.0
    %365 = vmatpush2.msra.mxu0 0.0
    %366 = vmatprep.subr.mxu0 0.0
    %367 = vmatpush2.msra.mxu0 0.0
    %368 = vmatprep.subr.mxu0 0.0
    %369 = vmatpush2.msra.mxu0 0.0
    %370 = vmatprep.subr.mxu0 0.0
    %371 = vmatpush2.msra.mxu0 0.0
    %372 = vmatprep.subr.mxu0 0.0
    %373 = vmatpush2.msra.mxu0 0.0
    %374 = vmatprep.subr.mxu0 0.0
    %375 = vmatpush2.msra.mxu0 0.0
    %376 = vmatprep.subr.mxu0 0.0
    %377 = vmatpush2.msra.mxu0 0.0
    %378 = vmatprep.subr.mxu0 0.0
    %379 = vmatpush2.msra.mxu0 0.0
    %380 = vmatprep.subr.mxu0 0.0
    %381 = vmatpush2.msra.mxu0 0.0
    %382 = vmatprep.mubr.f32.mxu0 0.0
    %383 = vmatmul.mubr.f32.gmra.mxu0 %v296
    %v384 = vpop.f32.mrf.mxu0
    %v385 = vadd.f32 %v317, %v384
    %v386 = vpop.f32.mrf.mxu0
    %387 = vdwg.mxu0
    %vm388 = vcmask 39936
    %389 = vst.msk [vmem:[#allocation8] sm:$0xff] %vm388, %v385
    // Predicated region
    $region26: #{tpu_custom_call.1} parent=1 // pred_check
      _
    $region27: #{tpu_custom_call.1} parent=1 // pred_check_branch
      %391 = sbr.rel (0) target = $region29
    $region28: #{tpu_custom_call.1} parent=1 // pred_region
      %s393 = ssub.s32 128, 128
      %394 = vsyncadd [#allocation4], %s393
      %s396 = sshll.u32 [#allocation8], 4
      %s397 = int_to_ptr.vmem [resolvable:$true] %s396
      %399 = dma.vmem_to_hbm [thread:$0]  %s397, 128, %s3, [#allocation4]
    $region29: #{tpu_custom_call.1} parent=1 // pred_fallthru
      _
    // Predicated region
    $region30: #{tpu_custom_call.1} parent=1 // pred_check
      _
    $region31: #{tpu_custom_call.1} parent=1 // pred_check_branch
      %401 = sbr.rel (0) target = $region33
    $region32: #{tpu_custom_call.1} parent=1 // pred_region
      %402 = dma.done [#allocation4], 128
    $region33: #{tpu_custom_call.1} parent=1 // pred_fallthru
      _
    %403 = vsyncpa [#allocation3], 1
    %404 = vsyncpa [#allocation6], 1
    %405 = vsyncpa [#allocation4], 1

</llo_original>
